<compile_context>
chip_gen: v7x
topology: tpu7x:2x2x1
jax: 0.10.0
libtpu: 0.0.40
codegen_flags: <defaults>
</compile_context>

<pallas_src>
import functools

import jax
import jax.numpy as jnp
from jax.experimental import pallas as pl
from jax.experimental.pallas import tpu as pltpu


def _round_up(a, b):
    return (a + b - 1) // b * b


def _resblock_kernel(xcur_ref, wcab_ref, bcab_ref, wrs_ref, brs_ref,
                     res_ref, skip_ref, xwin_ref, halo_ref,
                     *, K, dilation, pad, TT, TC, HP, HS, Cp, Crp, Csp,
                     compute_dtype):
    """One (batch, time-tile) grid step.

    xcur_ref : (1, TT, Cp)        current time tile (compute dtype)
    wcab_ref : (K, Cp, 2*Crp)     causal conv weights, GLU halves [a | b] fused
    bcab_ref : (1, 2*Crp)         f32 conv bias, [a | b]
    wrs_ref  : (Crp, Cp + Csp)    fused res/skip 1x1 weights [res | skip]
    brs_ref  : (1, Cp + Csp)      f32 fused res/skip bias
    res_ref  : (1, TT, Cp)
    skip_ref : (1, TT, Csp)
    xwin_ref : (HP + HS, Cp)      scratch: [causal halo | straddling prefix]
    halo_ref : (HP, Cp)           persistent scratch: last HP rows of prev tile
    """
    t = pl.program_id(1)

    if pad > 0:
        # Stage the causal halo + the straddling prefix of the current tile.
        # Tile 0's halo is the causal zero left-padding (produced in-kernel).
        @pl.when(t == 0)
        def _():
            xwin_ref[:HP, :] = jnp.zeros((HP, Cp), xwin_ref.dtype)

        @pl.when(t > 0)
        def _():
            xwin_ref[:HP, :] = halo_ref[...]

        xwin_ref[HP:, :] = xcur_ref[0, :HS, :]
        # Carry the last HP rows of this tile to the next grid step; the time
        # axis is "arbitrary", so tiles of one batch run in order per core.
        halo_ref[...] = xcur_ref[0, TT - HP:, :]

    # Loop-invariant broadcasts hoisted out of the chunk loop (JAX does not CSE
    # broadcast_in_dim); conv bias folded into the accumulator init.
    acc0 = jnp.broadcast_to(bcab_ref[...], (TC, 2 * Crp))        # f32
    brs = jnp.broadcast_to(brs_ref[...], (TC, Cp + Csp))         # f32

    # Fully unrolled chunk loop: static slice offsets everywhere, and the LLO
    # scheduler can interleave MXU pushes / VMEM loads / stores across chunks.
    for c in range(TT // TC):
        q = c * TC
        straddle = q < pad            # does this chunk reach into the halo?
        acc = acc0
        x_here = None
        for k in range(K):            # K is tiny (typically 2)
            s = (K - 1 - k) * dilation
            if straddle:
                xk = xwin_ref[HP + q - s:HP + q - s + TC, :]
            else:
                xk = xcur_ref[0, q - s:q - s + TC, :]
            acc = acc + jnp.dot(xk, wcab_ref[k],
                                preferred_element_type=jnp.float32)
            if s == 0:
                x_here = xk           # reuse the s==0 tap as the residual input

        # GLU in f32 (v5e VPU/EUP are not bf16-native); sigmoid -> EUP slot.
        # Lane slices at Crp (a multiple of 128) are free.
        gated = acc[:, :Crp] * jax.nn.sigmoid(acc[:, Crp:])      # (TC, Crp) f32
        g = gated.astype(compute_dtype)

        # Fused res/skip 1x1 convs: one 256-wide MXU matmul, lane-aligned split.
        out = jnp.dot(g, wrs_ref[...], preferred_element_type=jnp.float32) + brs
        res = out[:, :Cp] + x_here.astype(jnp.float32)
        res_ref[0, q:q + TC, :] = res.astype(res_ref.dtype)
        skip_ref[0, q:q + TC, :] = out[:, Cp:].astype(skip_ref.dtype)


def resblock_forward(x_ncw, params, *, kernel_size, dilation,
                     time_tile=2048, chunk_rows=256,
                     compute_dtype=jnp.bfloat16, out_dtype=None,
                     interpret=False):
    """WaveNet ResBlock forward.  x_ncw: (N, C, T) float (PyTorch NCW).

    params = (wc, bc, wr, br, ws, bs) with the causal conv weight in matmul
    form wc: (K, C, 2*Cr) (== PyTorch weight (2*Cr, C, K) permuted (2, 1, 0)),
    bc: (2*Cr,), wr: (Cr, C), br: (C,), ws: (Cr, Cs), bs: (Cs,).
    Returns (res, skip) in NCW, in `out_dtype` (default: compute_dtype).
    """
    wc, bc, wr, br, ws, bs = params
    N, C, T = x_ncw.shape
    K = kernel_size
    Cr = wr.shape[0]
    Cs = ws.shape[1]
    pad = (K - 1) * dilation
    if out_dtype is None:
        out_dtype = compute_dtype

    LANE = 128
    SUB = 8 * max(1, 4 // jnp.dtype(compute_dtype).itemsize)   # 8 f32, 16 bf16
    Cp = _round_up(C, LANE)
    Crp = _round_up(Cr, LANE)
    Csp = _round_up(Cs, LANE)

    # Time tiling: TT rows per grid step, TC rows per unrolled inner chunk,
    # HP halo rows (sublane-aligned, >= pad), HS rows staged into the window
    # scratch (only the chunks that straddle the halo need staging).
    HP = _round_up(max(pad, 1), SUB)
    TT0 = _round_up(min(time_tile, max(T, SUB)), SUB)
    TC = max(SUB, min(_round_up(chunk_rows, SUB), TT0))
    TT = _round_up(max(TT0, HP), TC)          # TT >= HP so the halo carry is 1 tile back
    HS = min(TT, _round_up(max(pad, 1), TC))
    Tp = _round_up(T, TT)
    n_tiles = Tp // TT

    # NCW -> NTC; pad channels to lane width and time up to whole tiles
    # (right-pad only: the conv is causal, trailing zeros never leak backwards).
    x_ntc = jnp.transpose(x_ncw, (0, 2, 1))
    x_proc = jnp.pad(x_ntc, ((0, 0), (0, Tp - T), (0, Cp - C))).astype(compute_dtype)
    # TODO(synk): for stacked ResBlocks keep activations in channel-padded NTC
    # between layers so this transpose/pad and the output slice/transpose are
    # done only once per stack, not once per block.

    # Fuse the GLU halves into one matmul operand (256-wide MXU output) and
    # zero-pad everything to lane width; padded gated channels are exactly zero
    # so padded res/skip lanes stay zero and are sliced off below.
    wc_a = jnp.pad(wc[:, :, :Cr], ((0, 0), (0, Cp - C), (0, Crp - Cr)))
    wc_b = jnp.pad(wc[:, :, Cr:], ((0, 0), (0, Cp - C), (0, Crp - Cr)))
    wcab = jnp.concatenate([wc_a, wc_b], axis=2).astype(compute_dtype)      # (K, Cp, 2*Crp)
    bcab = jnp.concatenate([jnp.pad(bc[:Cr], (0, Crp - Cr)),
                            jnp.pad(bc[Cr:], (0, Crp - Cr))]
                           ).reshape(1, 2 * Crp).astype(jnp.float32)

    # Fuse the two 1x1 convs into one matmul operand.
    wr_p = jnp.pad(wr, ((0, Crp - Cr), (0, Cp - C)))
    ws_p = jnp.pad(ws, ((0, Crp - Cr), (0, Csp - Cs)))
    wrs = jnp.concatenate([wr_p, ws_p], axis=1).astype(compute_dtype)       # (Crp, Cp+Csp)
    brs = jnp.concatenate([jnp.pad(br, (0, Cp - C)),
                           jnp.pad(bs, (0, Csp - Cs))]
                          ).reshape(1, Cp + Csp).astype(jnp.float32)

    kern = functools.partial(_resblock_kernel, K=K, dilation=dilation, pad=pad,
                             TT=TT, TC=TC, HP=HP, HS=HS,
                             Cp=Cp, Crp=Crp, Csp=Csp,
                             compute_dtype=compute_dtype)

    # VMEM budget: double-buffered in/out tiles + scratch + weights + f32 value
    # temporaries, x2 margin; floor 24 MiB, cap 48 MiB (v7x has only 64 MiB of
    # physical VMEM per TensorCore — leave headroom for Mosaic internal scratch).
    bpe_c = jnp.dtype(compute_dtype).itemsize
    bpe_o = jnp.dtype(out_dtype).itemsize
    need = (2 * TT * Cp * bpe_c                                   # input tile (x2 bufs)
            + 2 * TT * (Cp + Csp) * bpe_o                         # output tiles (x2 bufs)
            + (2 * HP + HS) * Cp * bpe_c                          # xwin + halo scratch
            + 2 * (K * Cp * 2 * Crp + Crp * (Cp + Csp)) * bpe_c   # weights
            + 4 * TC * (2 * Crp + Cp + Csp) * 4)                  # f32 intermediates
    vmem_limit = int(min(max(2 * need, 24 << 20), 48 << 20))

    const2 = lambda n, t: (0, 0)
    const3 = lambda n, t: (0, 0, 0)

    res_p, skip_p = pl.pallas_call(
        kern,
        out_shape=(
            jax.ShapeDtypeStruct((N, Tp, Cp), out_dtype),
            jax.ShapeDtypeStruct((N, Tp, Csp), out_dtype),
        ),
        grid_spec=pltpu.PrefetchScalarGridSpec(
            num_scalar_prefetch=0,
            grid=(N, n_tiles),
            in_specs=[
                # current time tile
                pl.BlockSpec((1, TT, Cp), lambda n, t: (n, t, 0)),
                # loop-invariant weights/biases (constant index maps -> no re-fetch)
                pl.BlockSpec((K, Cp, 2 * Crp), const3),
                pl.BlockSpec((1, 2 * Crp), const2),
                pl.BlockSpec((Crp, Cp + Csp), const2),
                pl.BlockSpec((1, Cp + Csp), const2),
            ],
            out_specs=[
                pl.BlockSpec((1, TT, Cp), lambda n, t: (n, t, 0)),
                pl.BlockSpec((1, TT, Csp), lambda n, t: (n, t, 0)),
            ],
            scratch_shapes=[
                pltpu.VMEM((HP + HS, Cp), compute_dtype),   # staged window
                pltpu.VMEM((HP, Cp), compute_dtype),        # persistent halo carry
            ],
        ),
        compiler_params=pltpu.CompilerParams(
            # time axis must be "arbitrary": the halo scratch carries state
            # between consecutive time tiles; the batch axis feeds megacore.
            dimension_semantics=("parallel", "arbitrary"),
            vmem_limit_bytes=vmem_limit,
        ),
        interpret=interpret,
    )(x_proc, wcab, bcab, wrs, brs)

    res = jnp.transpose(res_p[:, :T, :C], (0, 2, 1))
    skip = jnp.transpose(skip_p[:, :T, :Cs], (0, 2, 1))
    return res, skip


def _reference_forward(x_ncw, params, *, kernel_size, dilation):
    """Pure-JAX f32 reference (NCW in/out), mirrors PyTorch semantics."""
    wc, bc, wr, br, ws, bs = params              # wc: (K, C, 2*Cr) matmul form
    N, C, T = x_ncw.shape
    K = kernel_size
    Cr = wr.shape[0]
    pad = (K - 1) * dilation
    x_ntc = jnp.transpose(x_ncw, (0, 2, 1))
    x_pad = jnp.pad(x_ntc, ((0, 0), (pad, 0), (0, 0)))
    acc = bc[None, None, :]
    for k in range(K):
        xk = x_pad[:, k * dilation:k * dilation + T, :]
        acc = acc + jnp.einsum('ntc,cd->ntd', xk, wc[k])
    gated = acc[..., :Cr] * jax.nn.sigmoid(acc[..., Cr:])
    res = jnp.einsum('ntr,rc->ntc', gated, wr) + br[None, None, :] + x_ntc
    skip = jnp.einsum('ntr,rs->nts', gated, ws) + bs[None, None, :]
    return jnp.transpose(res, (0, 2, 1)), jnp.transpose(skip, (0, 2, 1))


if __name__ == "__main__":
    # Small synthetic config: n_chans=4, n_chans_res=6, n_chans_skip=5, K=2.
    N, C, T = 2, 4, 16
    Cr, Cs = 6, 5
    K, dil = 2, 2

    key = jax.random.PRNGKey(0)
    ks = jax.random.split(key, 7)
    wc = jax.random.normal(ks[0], (K, C, 2 * Cr), jnp.float32) * 0.3
    bc = jax.random.normal(ks[1], (2 * Cr,), jnp.float32) * 0.1
    wr = jax.random.normal(ks[2], (Cr, C), jnp.float32) * 0.3
    br = jax.random.normal(ks[3], (C,), jnp.float32) * 0.1
    ws = jax.random.normal(ks[4], (Cr, Cs), jnp.float32) * 0.3
    bs = jax.random.normal(ks[5], (Cs,), jnp.float32) * 0.1
    params = (wc, bc, wr, br, ws, bs)

    x = jax.random.normal(ks[6], (N, C, T), jnp.float32)

    # 1) f32 compute, single time tile (default tile sizes collapse to T).
    res, skip = resblock_forward(x, params, kernel_size=K, dilation=dil,
                                 compute_dtype=jnp.float32)
    jax.block_until_ready((res, skip))
    res_ref, skip_ref = _reference_forward(x, params, kernel_size=K, dilation=dil)
    assert res.shape == (N, C, T) and skip.shape == (N, Cs, T)
    assert jnp.allclose(res, res_ref, atol=1e-3, rtol=1e-3)
    assert jnp.allclose(skip, skip_ref, atol=1e-3, rtol=1e-3)

    # 2) f32 compute, multiple time tiles: exercises the persistent halo carry
    #    across tile boundaries and both chunk paths (straddle vs direct).
    T2, dil2 = 40, 4
    x2 = jax.random.normal(jax.random.PRNGKey(1), (N, C, T2), jnp.float32)
    res2, skip2 = resblock_forward(x2, params, kernel_size=K, dilation=dil2,
                                   time_tile=16, chunk_rows=8,
                                   compute_dtype=jnp.float32)
    jax.block_until_ready((res2, skip2))
    res2_ref, skip2_ref = _reference_forward(x2, params, kernel_size=K, dilation=dil2)
    assert jnp.allclose(res2, res2_ref, atol=1e-3, rtol=1e-3)
    assert jnp.allclose(skip2, skip2_ref, atol=1e-3, rtol=1e-3)

    # 3) default bf16 matmul operands + bf16 outputs (f32 accumulation) — loose.
    res3, skip3 = resblock_forward(x2, params, kernel_size=K, dilation=dil2,
                                   time_tile=16, chunk_rows=8)
    jax.block_until_ready((res3, skip3))
    assert jnp.allclose(res3.astype(jnp.float32), res2_ref, atol=1e-1, rtol=1e-1)
    assert jnp.allclose(skip3.astype(jnp.float32), skip2_ref, atol=1e-1, rtol=1e-1)

    print("KERNEL_OK")
</pallas_src>

<mosaic_0001>
module attributes {stable_mosaic.version = 11 : i64} {
  func.func @_resblock_kernel(%arg0: i32, %arg1: i32, %arg2: memref<1x16x128xf32, #tpu.memory_space<vmem>>, %arg3: memref<2x128x256xf32, #tpu.memory_space<vmem>>, %arg4: memref<1x256xf32, #tpu.memory_space<vmem>>, %arg5: memref<128x256xf32, #tpu.memory_space<vmem>>, %arg6: memref<1x256xf32, #tpu.memory_space<vmem>>, %arg7: memref<1x16x128xf32, #tpu.memory_space<vmem>>, %arg8: memref<1x16x128xf32, #tpu.memory_space<vmem>>, %arg9: memref<24x128xf32, #tpu.memory_space<vmem>>, %arg10: memref<8x128xf32, #tpu.memory_space<vmem>>) attributes {dimension_semantics = [#tpu.dimension_semantics<parallel>, #tpu.dimension_semantics<arbitrary>], iteration_bounds = array<i64: 2, 1>, scalar_prefetch = 0 : i64, scratch_operands = 2 : i64, tpu.core_type = #tpu.core_type<tc>, window_params = [{transform_indices = @transform_0, window_bounds = array<i64: 1, 16, 128>}, {pipeline_mode = #tpu.pipeline_mode<synchronous>, transform_indices = @transform_1, window_bounds = array<i64: 2, 128, 256>}, {pipeline_mode = #tpu.pipeline_mode<synchronous>, transform_indices = @transform_2, window_bounds = array<i64: 1, 256>}, {pipeline_mode = #tpu.pipeline_mode<synchronous>, transform_indices = @transform_3, window_bounds = array<i64: 128, 256>}, {pipeline_mode = #tpu.pipeline_mode<synchronous>, transform_indices = @transform_4, window_bounds = array<i64: 1, 256>}, {transform_indices = @transform_5, window_bounds = array<i64: 1, 16, 128>}, {transform_indices = @transform_6, window_bounds = array<i64: 1, 16, 128>}]} {
    %c0_i32 = arith.constant 0 : i32
    %0 = arith.cmpi eq, %arg1, %c0_i32 : i32
    %1 = arith.extui %0 : i1 to i32
    %c0_i32_0 = arith.constant 0 : i32
    %2 = arith.cmpi ne, %1, %c0_i32_0 : i32
    scf.if %2 {
      %cst_34 = arith.constant 0.000000e+00 : f32
      %48 = vector.broadcast %cst_34 : f32 to vector<8x128xf32>
      %c0_35 = arith.constant 0 : index
      %c0_36 = arith.constant 0 : index
      %49 = vector.load %arg9[%c0_35, %c0_36] : memref<24x128xf32, #tpu.memory_space<vmem>>, vector<8x128xf32>
      tpu.vector_store %arg9[%c0_35, %c0_36], %48 {strides = array<i32>} : memref<24x128xf32, #tpu.memory_space<vmem>>, vector<8x128xf32>,
    } else {
    }
    %c0_i32_1 = arith.constant 0 : i32
    %3 = arith.cmpi sgt, %arg1, %c0_i32_1 : i32
    %4 = arith.extui %3 : i1 to i32
    %c0_i32_2 = arith.constant 0 : i32
    %5 = arith.cmpi ne, %4, %c0_i32_2 : i32
    scf.if %5 {
      %c0_34 = arith.constant 0 : index
      %c0_35 = arith.constant 0 : index
      %48 = vector.load %arg10[%c0_34, %c0_35] : memref<8x128xf32, #tpu.memory_space<vmem>>, vector<8x128xf32>
      %c0_36 = arith.constant 0 : index
      %c0_37 = arith.constant 0 : index
      %49 = vector.load %arg9[%c0_36, %c0_37] : memref<24x128xf32, #tpu.memory_space<vmem>>, vector<8x128xf32>
      tpu.vector_store %arg9[%c0_36, %c0_37], %48 {strides = array<i32>} : memref<24x128xf32, #tpu.memory_space<vmem>>, vector<8x128xf32>,
    } else {
    }
    %c0 = arith.constant 0 : index
    %c0_3 = arith.constant 0 : index
    %c0_4 = arith.constant 0 : index
    %6 = vector.load %arg2[%c0, %c0_3, %c0_4] : memref<1x16x128xf32, #tpu.memory_space<vmem>>, vector<1x16x128xf32>
    %7 = vector.shape_cast %6 : vector<1x16x128xf32> to vector<16x128xf32>
    %c8 = arith.constant 8 : index
    %c0_5 = arith.constant 0 : index
    %8 = vector.load %arg9[%c8, %c0_5] : memref<24x128xf32, #tpu.memory_space<vmem>>, vector<16x128xf32>
    tpu.vector_store %arg9[%c8, %c0_5], %7 {strides = array<i32>} : memref<24x128xf32, #tpu.memory_space<vmem>>, vector<16x128xf32>,
    %c0_6 = arith.constant 0 : index
    %c8_7 = arith.constant 8 : index
    %c0_8 = arith.constant 0 : index
    %9 = vector.load %arg2[%c0_6, %c8_7, %c0_8] : memref<1x16x128xf32, #tpu.memory_space<vmem>>, vector<1x8x128xf32>
    %10 = vector.shape_cast %9 : vector<1x8x128xf32> to vector<8x128xf32>
    %c0_9 = arith.constant 0 : index
    %c0_10 = arith.constant 0 : index
    %11 = vector.load %arg10[%c0_9, %c0_10] : memref<8x128xf32, #tpu.memory_space<vmem>>, vector<8x128xf32>
    tpu.vector_store %arg10[%c0_9, %c0_10], %10 {strides = array<i32>} : memref<8x128xf32, #tpu.memory_space<vmem>>, vector<8x128xf32>,
    %c0_11 = arith.constant 0 : index
    %c0_12 = arith.constant 0 : index
    %12 = vector.load %arg4[%c0_11, %c0_12] : memref<1x256xf32, #tpu.memory_space<vmem>>, vector<1x256xf32>
    %13 = vector.shape_cast %12 : vector<1x256xf32> to vector<1x256xf32>
    %14 = vector.broadcast %13 : vector<1x256xf32> to vector<16x256xf32>
    %c0_13 = arith.constant 0 : index
    %c0_14 = arith.constant 0 : index
    %15 = vector.load %arg6[%c0_13, %c0_14] : memref<1x256xf32, #tpu.memory_space<vmem>>, vector<1x256xf32>
    %16 = vector.shape_cast %15 : vector<1x256xf32> to vector<1x256xf32>
    %17 = vector.broadcast %16 : vector<1x256xf32> to vector<16x256xf32>
    %c6 = arith.constant 6 : index
    %c0_15 = arith.constant 0 : index
    %18 = vector.load %arg9[%c6, %c0_15] : memref<24x128xf32, #tpu.memory_space<vmem>>, vector<16x128xf32>
    %c0_16 = arith.constant 0 : index
    %c0_17 = arith.constant 0 : index
    %c0_18 = arith.constant 0 : index
    %19 = vector.load %arg3[%c0_16, %c0_17, %c0_18] : memref<2x128x256xf32, #tpu.memory_space<vmem>>, vector<1x128x256xf32>
    %20 = vector.shape_cast %19 : vector<1x128x256xf32> to vector<128x256xf32>
    %cst = arith.constant dense<0.000000e+00> : vector<16x256xf32>
    %21 = tpu.matmul %18, %20, %cst {dimension_numbers = #tpu.dot_dimension_numbers<[1], [0], [0], [1], [0, 0, 1, 1], [], []>} : vector<16x128xf32>, vector<128x256xf32>, vector<16x256xf32> -> vector<16x256xf32>
    %22 = arith.addf %14, %21 : vector<16x256xf32>
    %c8_19 = arith.constant 8 : index
    %c0_20 = arith.constant 0 : index
    %23 = vector.load %arg9[%c8_19, %c0_20] : memref<24x128xf32, #tpu.memory_space<vmem>>, vector<16x128xf32>
    %c1 = arith.constant 1 : index
    %c0_21 = arith.constant 0 : index
    %c0_22 = arith.constant 0 : index
    %24 = vector.load %arg3[%c1, %c0_21, %c0_22] : memref<2x128x256xf32, #tpu.memory_space<vmem>>, vector<1x128x256xf32>
    %25 = vector.shape_cast %24 : vector<1x128x256xf32> to vector<128x256xf32>
    %cst_23 = arith.constant dense<0.000000e+00> : vector<16x256xf32>
    %26 = tpu.matmul %23, %25, %cst_23 {dimension_numbers = #tpu.dot_dimension_numbers<[1], [0], [0], [1], [0, 0, 1, 1], [], []>} : vector<16x128xf32>, vector<128x256xf32>, vector<16x256xf32> -> vector<16x256xf32>
    %27 = arith.addf %22, %26 : vector<16x256xf32>
    %28 = vector.extract_strided_slice %27 {offsets = [0, 0], sizes = [16, 128], strides = [1, 1]} : vector<16x256xf32> to vector<16x128xf32>
    %29 = vector.extract_strided_slice %27 {offsets = [0, 128], sizes = [16, 128], strides = [1, 1]} : vector<16x256xf32> to vector<16x128xf32>
    %30 = arith.negf %29 : vector<16x128xf32>
    %31 = math.exp %30 : vector<16x128xf32>
    %cst_24 = arith.constant 1.000000e+00 : f32
    %32 = vector.broadcast %cst_24 : f32 to vector<16x128xf32>
    %33 = arith.addf %32, %31 : vector<16x128xf32>
    %34 = arith.divf %32, %33 : vector<16x128xf32>
    %35 = arith.mulf %28, %34 : vector<16x128xf32>
    %c0_25 = arith.constant 0 : index
    %c0_26 = arith.constant 0 : index
    %36 = vector.load %arg5[%c0_25, %c0_26] : memref<128x256xf32, #tpu.memory_space<vmem>>, vector<128x256xf32>
    %cst_27 = arith.constant dense<0.000000e+00> : vector<16x256xf32>
    %37 = tpu.matmul %35, %36, %cst_27 {dimension_numbers = #tpu.dot_dimension_numbers<[1], [0], [0], [1], [0, 0, 1, 1], [], []>} : vector<16x128xf32>, vector<128x256xf32>, vector<16x256xf32> -> vector<16x256xf32>
    %38 = arith.addf %37, %17 : vector<16x256xf32>
    %39 = vector.extract_strided_slice %38 {offsets = [0, 0], sizes = [16, 128], strides = [1, 1]} : vector<16x256xf32> to vector<16x128xf32>
    %40 = arith.addf %39, %23 : vector<16x128xf32>
    %c0_28 = arith.constant 0 : index
    %c0_29 = arith.constant 0 : index
    %c0_30 = arith.constant 0 : index
    %41 = vector.load %arg7[%c0_28, %c0_29, %c0_30] : memref<1x16x128xf32, #tpu.memory_space<vmem>>, vector<1x16x128xf32>
    %42 = vector.shape_cast %41 : vector<1x16x128xf32> to vector<16x128xf32>
    %43 = vector.shape_cast %40 : vector<16x128xf32> to vector<1x16x128xf32>
    tpu.vector_store %arg7[%c0_28, %c0_29, %c0_30], %43 {strides = array<i32>} : memref<1x16x128xf32, #tpu.memory_space<vmem>>, vector<1x16x128xf32>,
    %44 = vector.extract_strided_slice %38 {offsets = [0, 128], sizes = [16, 128], strides = [1, 1]} : vector<16x256xf32> to vector<16x128xf32>
    %c0_31 = arith.constant 0 : index
    %c0_32 = arith.constant 0 : index
    %c0_33 = arith.constant 0 : index
    %45 = vector.load %arg8[%c0_31, %c0_32, %c0_33] : memref<1x16x128xf32, #tpu.memory_space<vmem>>, vector<1x16x128xf32>
    %46 = vector.shape_cast %45 : vector<1x16x128xf32> to vector<16x128xf32>
    %47 = vector.shape_cast %44 : vector<16x128xf32> to vector<1x16x128xf32>
    tpu.vector_store %arg8[%c0_31, %c0_32, %c0_33], %47 {strides = array<i32>} : memref<1x16x128xf32, #tpu.memory_space<vmem>>, vector<1x16x128xf32>,
    return
  }
  func.func @transform_0(%arg0: i32, %arg1: i32) -> (i32, i32, i32) {
    %c0_i32 = arith.constant 0 : i32
    %c0_i32_0 = arith.constant 0 : i32
    return %arg0, %arg1, %c0_i32 : i32, i32, i32
  }
  func.func @transform_1(%arg0: i32, %arg1: i32) -> (i32, i32, i32) {
    %c0_i32 = arith.constant 0 : i32
    %c0_i32_0 = arith.constant 0 : i32
    %c0_i32_1 = arith.constant 0 : i32
    %c0_i32_2 = arith.constant 0 : i32
    return %c0_i32, %c0_i32_0, %c0_i32_1 : i32, i32, i32
  }
  func.func @transform_2(%arg0: i32, %arg1: i32) -> (i32, i32) {
    %c0_i32 = arith.constant 0 : i32
    %c0_i32_0 = arith.constant 0 : i32
    %c0_i32_1 = arith.constant 0 : i32
    return %c0_i32, %c0_i32_0 : i32, i32
  }
  func.func @transform_3(%arg0: i32, %arg1: i32) -> (i32, i32) {
    %c0_i32 = arith.constant 0 : i32
    %c0_i32_0 = arith.constant 0 : i32
    %c0_i32_1 = arith.constant 0 : i32
    return %c0_i32, %c0_i32_0 : i32, i32
  }
  func.func @transform_4(%arg0: i32, %arg1: i32) -> (i32, i32) {
    %c0_i32 = arith.constant 0 : i32
    %c0_i32_0 = arith.constant 0 : i32
    %c0_i32_1 = arith.constant 0 : i32
    return %c0_i32, %c0_i32_0 : i32, i32
  }
  func.func @transform_5(%arg0: i32, %arg1: i32) -> (i32, i32, i32) {
    %c0_i32 = arith.constant 0 : i32
    %c0_i32_0 = arith.constant 0 : i32
    return %arg0, %arg1, %c0_i32 : i32, i32, i32
  }
  func.func @transform_6(%arg0: i32, %arg1: i32) -> (i32, i32, i32) {
    %c0_i32 = arith.constant 0 : i32
    %c0_i32_0 = arith.constant 0 : i32
    return %arg0, %arg1, %c0_i32 : i32, i32, i32
  }
}

</mosaic_0001>

<llo_original>
// kernel: tpu_custom_call.1
$region0: #{tpu_custom_call.1}
  #allocation0 [shape = 'u32[]', space=smem, size = 0x4, offset = 0x4, fixed_abs, tag = 'smem constant byte address 0x4 - core index']
  #allocation1 [shape = 'u32[144,128]{1,0:T(1,128)}', space=vmem, size = 0x12000, scoped, tag = 'internal scratch']
  #allocation2 [shape = 'f32[24,128]{1,0:T(8,128)}', space=vmem, size = 0x3000, scoped, tag = 'scratch operand']
  #allocation3 [shape = 'f32[8,128]{1,0:T(8,128)}', space=vmem, size = 0x1000, scoped, tag = 'scratch operand']
  %s0 = inlined_call_operand.hbm [shape: f32[2,16,128], index: 0, kind: input, shape index: {}]
  %s1 = inlined_call_operand.hbm [shape: f32[2,128,256], index: 1, kind: input, shape index: {}]
  %s2 = inlined_call_operand.vmem [shape: f32[1,256], index: 2, kind: input, shape index: {}]
  %s3 = inlined_call_operand.hbm [shape: f32[128,256], index: 3, kind: input, shape index: {}]
  %s4 = inlined_call_operand.vmem [shape: f32[1,256], index: 4, kind: input, shape index: {}]
  %s5 = inlined_call_operand.hbm [shape: f32[2,16,128], index: 5, kind: output, shape index: {0}]
  %s6 = inlined_call_operand.hbm [shape: f32[2,16,128], index: 6, kind: output, shape index: {1}]
  %7 = xla_tuple %s5, %s6
  %s8 = sld [smem:[#allocation0]]
  $region81: #{tpu_custom_call.1} parent=0
    _
  %s10 = ssub.s32 1, %s8
  %s11 = scalar_select 0, %s10, %s8
  $region1: #{tpu_custom_call.1} parent=0
    #allocation4 [shape = 'u8[16384]{0}', space=vmem, size = 0x4000, scoped, tag = 'input window, operand 0']
    #allocation5 [shape = 's32[2]{0}', space=sflag, size = 0x8, scoped, tag = 'scoped memory for tpu_custom_call.1']
    #allocation6 [shape = 's32[2]{0}', space=sflag, size = 0x8, scoped, tag = 'scoped memory for tpu_custom_call.1']
    #allocation7 [shape = 'u8[262144]{0}', space=vmem, size = 0x40000, scoped, tag = 'input window, operand 1, single buffered']
    #allocation8 [shape = 's32[1]{0}', space=sflag, size = 0x4, scoped, tag = 'scoped memory for tpu_custom_call.1']
    #allocation9 [shape = 'u8[131072]{0}', space=vmem, size = 0x20000, scoped, tag = 'input window, operand 3, single buffered']
    #allocation10 [shape = 'u8[16384]{0}', space=vmem, size = 0x4000, scoped, tag = 'output window, operand 0']
    #allocation11 [shape = 'u8[16384]{0}', space=vmem, size = 0x4000, scoped, tag = 'output window, operand 1']
    #allocation12 [shape = 's32[2]{0}', space=sflag, size = 0x8, scoped, tag = 'scoped memory for tpu_custom_call.1']
    %12 = vsyncpa [#allocation5], 0
    %s13 = scalar_lea.sflag [#allocation5], 1
    %14 = vsyncpa %s13, 0
    %15 = vsyncpa [#allocation8], 0
    %16 = vsyncpa [#allocation6], 0
    %s17 = scalar_lea.sflag [#allocation6], 1
    %18 = vsyncpa %s17, 0
    %19 = vsyncpa [#allocation12], 0
    %s20 = scalar_lea.sflag [#allocation12], 1
    %21 = vsyncpa %s20, 0
    loop: start=0, step=1, limit=4
    $region2: #{tpu_custom_call.1} parent=1 // loop_pre_header
      _
    $region3: #{tpu_custom_call.1} parent=1 // loop_header
      %s23 = sphi 0, %s27
      %p24 = scmp.ge.s32.totalorder %s23, 4
      %s30 = sphi 0, %s42
      %s31 = sphi 0, %s38
      %s32 = sphi 0, %s30
      %s33 = sphi 0, %s31
      %s34 = sphi 0, %s32
      %s35 = sphi 0, %s33
      %s47 = sphi 0, %s49
      %s50 = sphi 0, %s47
      %s51 = sphi 0, %s50
      %s67 = sphi 0, %s51
      %s71 = sphi 0, %s71
      %s73 = sphi 0, %s71
      %s74 = sphi 0, %s73
      %s88 = sphi 0, %s74
      %s92 = sphi 0, %s92
      %s94 = sphi 0, %s92
      %s95 = sphi 0, %s94
      %s109 = sphi 0, %s95
      %s113 = sphi 0, %s113
      %s115 = sphi 0, %s113
      %s116 = sphi 0, %s115
      %s130 = sphi 0, %s116
      %s134 = sphi 0, %s134
      %s136 = sphi 0, %s134
      %s137 = sphi 0, %s136
      %s151 = sphi 0, %s137
      %s159 = sphi 0, %s161
      %s162 = sphi 0, %s159
      %s163 = sphi 0, %s162
      %s179 = sphi 0, %s163
      %s187 = sphi 0, %s189
      %s190 = sphi 0, %s187
      %s191 = sphi 0, %s190
      %s207 = sphi 0, %s191
    $region4: #{tpu_custom_call.1} parent=1 // loop_header_branch
      %26 = sbr.rel (%p24) target = $region8
    $region5: #{tpu_custom_call.1} parent=1 // loop_body
      %s28 = ssub.s32 %s23, 1
      %s29 = ssub.s32 %s23, 2
      %s36 = sadd.s32 1, %s31
      %p37 = scmp.ge.s32.totalorder %s36, 1
      %s38 = scalar_select %p37, 0, %s36
      %s39 = sadd.s32 1, %s30
      %s40 = scalar_select %p37, %s39, %s30
      %p41 = scmp.ge.s32.totalorder %s40, 2
      %s42 = scalar_select %p41, 0, %s40
      %s43 = ssub.s32 %s30, %s42
      %s44 = ssub.s32 %s31, %s38
      %s45 = sor.u32 %s43, %s44
      %p46 = scmp.eq.s32.totalorder %s45, 0
      %s48 = sadd.s32 %s47, 1
      %s49 = scalar_select %p46, %s47, %s48
      %p52 = pneg %p46
      %p53 = scmp.eq.s32.totalorder %s23, 1
      %p54 = por %p52, %p53
      %p55 = scmp.ne.s32.totalorder %s47, %s50
      %p56 = scmp.eq.s32.totalorder %s23, 0
      %p57 = por %p55, %p56
      %p58 = scmp.ne.s32.totalorder %s47, %s50
      %p59 = scmp.eq.s32.totalorder %s28, 1
      %p60 = por %p58, %p59
      %p61 = scmp.ne.s32.totalorder %s50, %s51
      %p62 = scmp.eq.s32.totalorder %s28, 0
      %p63 = por %p61, %p62
      %p64 = scmp.ne.s32.totalorder %s50, %s51
      %p65 = scmp.eq.s32.totalorder %s29, 1
      %p66 = por %p64, %p65
      %p68 = scmp.ne.s32.totalorder %s51, %s67
      %p69 = scmp.eq.s32.totalorder %s29, 0
      %p70 = por %p68, %p69
      %s72 = sadd.s32 %s71, 1
      %p75 = scmp.eq.s32.totalorder %s23, 1
      %p76 = scmp.ne.s32.totalorder %s71, %s73
      %p77 = scmp.eq.s32.totalorder %s23, 0
      %p78 = por %p76, %p77
      %p79 = scmp.ne.s32.totalorder %s71, %s73
      %p80 = scmp.eq.s32.totalorder %s28, 1
      %p81 = por %p79, %p80
      %p82 = scmp.ne.s32.totalorder %s73, %s74
      %p83 = scmp.eq.s32.totalorder %s28, 0
      %p84 = por %p82, %p83
      %p85 = scmp.ne.s32.totalorder %s73, %s74
      %p86 = scmp.eq.s32.totalorder %s29, 1
      %p87 = por %p85, %p86
      %p89 = scmp.ne.s32.totalorder %s74, %s88
      %p90 = scmp.eq.s32.totalorder %s29, 0
      %p91 = por %p89, %p90
      %s93 = sadd.s32 %s92, 1
      %p96 = scmp.eq.s32.totalorder %s23, 1
      %p97 = scmp.ne.s32.totalorder %s92, %s94
      %p98 = scmp.eq.s32.totalorder %s23, 0
      %p99 = por %p97, %p98
      %p100 = scmp.ne.s32.totalorder %s92, %s94
      %p101 = scmp.eq.s32.totalorder %s28, 1
      %p102 = por %p100, %p101
      %p103 = scmp.ne.s32.totalorder %s94, %s95
      %p104 = scmp.eq.s32.totalorder %s28, 0
      %p105 = por %p103, %p104
      %p106 = scmp.ne.s32.totalorder %s94, %s95
      %p107 = scmp.eq.s32.totalorder %s29, 1
      %p108 = por %p106, %p107
      %p110 = scmp.ne.s32.totalorder %s95, %s109
      %p111 = scmp.eq.s32.totalorder %s29, 0
      %p112 = por %p110, %p111
      %s114 = sadd.s32 %s113, 1
      %p117 = scmp.eq.s32.totalorder %s23, 1
      %p118 = scmp.ne.s32.totalorder %s113, %s115
      %p119 = scmp.eq.s32.totalorder %s23, 0
      %p120 = por %p118, %p119
      %p121 = scmp.ne.s32.totalorder %s113, %s115
      %p122 = scmp.eq.s32.totalorder %s28, 1
      %p123 = por %p121, %p122
      %p124 = scmp.ne.s32.totalorder %s115, %s116
      %p125 = scmp.eq.s32.totalorder %s28, 0
      %p126 = por %p124, %p125
      %p127 = scmp.ne.s32.totalorder %s115, %s116
      %p128 = scmp.eq.s32.totalorder %s29, 1
      %p129 = por %p127, %p128
      %p131 = scmp.ne.s32.totalorder %s116, %s130
      %p132 = scmp.eq.s32.totalorder %s29, 0
      %p133 = por %p131, %p132
      %s135 = sadd.s32 %s134, 1
      %p138 = scmp.eq.s32.totalorder %s23, 1
      %p139 = scmp.ne.s32.totalorder %s134, %s136
      %p140 = scmp.eq.s32.totalorder %s23, 0
      %p141 = por %p139, %p140
      %p142 = scmp.ne.s32.totalorder %s134, %s136
      %p143 = scmp.eq.s32.totalorder %s28, 1
      %p144 = por %p142, %p143
      %p145 = scmp.ne.s32.totalorder %s136, %s137
      %p146 = scmp.eq.s32.totalorder %s28, 0
      %p147 = por %p145, %p146
      %p148 = scmp.ne.s32.totalorder %s136, %s137
      %p149 = scmp.eq.s32.totalorder %s29, 1
      %p150 = por %p148, %p149
      %p152 = scmp.ne.s32.totalorder %s137, %s151
      %p153 = scmp.eq.s32.totalorder %s29, 0
      %p154 = por %p152, %p153
      %s155 = ssub.s32 %s30, %s42
      %s156 = ssub.s32 %s31, %s38
      %s157 = sor.u32 %s155, %s156
      %p158 = scmp.eq.s32.totalorder %s157, 0
      %s160 = sadd.s32 %s159, 1
      %s161 = scalar_select %p158, %s159, %s160
      %p164 = pneg %p158
      %p165 = scmp.eq.s32.totalorder %s23, 1
      %p166 = por %p164, %p165
      %p167 = scmp.ne.s32.totalorder %s159, %s162
      %p168 = scmp.eq.s32.totalorder %s23, 0
      %p169 = por %p167, %p168
      %p170 = scmp.ne.s32.totalorder %s159, %s162
      %p171 = scmp.eq.s32.totalorder %s28, 1
      %p172 = por %p170, %p171
      %p173 = scmp.ne.s32.totalorder %s162, %s163
      %p174 = scmp.eq.s32.totalorder %s28, 0
      %p175 = por %p173, %p174
      %p176 = scmp.ne.s32.totalorder %s162, %s163
      %p177 = scmp.eq.s32.totalorder %s29, 1
      %p178 = por %p176, %p177
      %p180 = scmp.ne.s32.totalorder %s163, %s179
      %p181 = scmp.eq.s32.totalorder %s29, 0
      %p182 = por %p180, %p181
      %s183 = ssub.s32 %s30, %s42
      %s184 = ssub.s32 %s31, %s38
      %s185 = sor.u32 %s183, %s184
      %p186 = scmp.eq.s32.totalorder %s185, 0
      %s188 = sadd.s32 %s187, 1
      %s189 = scalar_select %p186, %s187, %s188
      %p192 = pneg %p186
      %p193 = scmp.eq.s32.totalorder %s23, 1
      %p194 = por %p192, %p193
      %p195 = scmp.ne.s32.totalorder %s187, %s190
      %p196 = scmp.eq.s32.totalorder %s23, 0
      %p197 = por %p195, %p196
      %p198 = scmp.ne.s32.totalorder %s187, %s190
      %p199 = scmp.eq.s32.totalorder %s28, 1
      %p200 = por %p198, %p199
      %p201 = scmp.ne.s32.totalorder %s190, %s191
      %p202 = scmp.eq.s32.totalorder %s28, 0
      %p203 = por %p201, %p202
      %p204 = scmp.ne.s32.totalorder %s190, %s191
      %p205 = scmp.eq.s32.totalorder %s29, 1
      %p206 = por %p204, %p205
      %p208 = scmp.ne.s32.totalorder %s191, %s207
      %p209 = scmp.eq.s32.totalorder %s29, 0
      %p210 = por %p208, %p209
      %p211 = scmp.le.s32.totalorder 1, %s23
      %p212 = scmp.lt.s32.totalorder %s23, 3
      %p213 = pnand %p211, %p212
      %p214 = pneg %p213
      // Predicated region
      $region9: #{tpu_custom_call.1} parent=5 // pred_check
        _
      $region10: #{tpu_custom_call.1} parent=5 // pred_check_branch
        %216 = sbr.rel (%p213) target = $region12
      $region11: #{tpu_custom_call.1} parent=5 // pred_region
        %s217 = ssub.s32 %s23, 1
        // Predicated region
        $region13: #{tpu_custom_call.1} parent=11 // pred_check
          %p218 = pneg %p84
        $region14: #{tpu_custom_call.1} parent=11 // pred_check_branch
          %220 = sbr.rel (%p218) target = $region16
        $region15: #{tpu_custom_call.1} parent=11 // pred_region
          %s222 = ssub.s32 8192, 8192
          %223 = vsyncadd [#allocation8], %s222
          %s224 = sshll.u32 [#allocation7], 4
          %s225 = int_to_ptr.vmem [resolvable:$true] %s224
          %230 = dma.hbm_to_vmem [thread:$0]  %s1, 8192, %s225, [#allocation8], 256, 256, 16
        $region16: #{tpu_custom_call.1} parent=11 // pred_fallthru
          _
        // Predicated region
        $region17: #{tpu_custom_call.1} parent=11 // pred_check
          %p231 = pneg %p105
        $region18: #{tpu_custom_call.1} parent=11 // pred_check_branch
          %233 = sbr.rel (%p231) target = $region20
        $region19: #{tpu_custom_call.1} parent=11 // pred_region
          _
        $region20: #{tpu_custom_call.1} parent=11 // pred_fallthru
          _
        // Predicated region
        $region21: #{tpu_custom_call.1} parent=11 // pred_check
          %p234 = pneg %p126
        $region22: #{tpu_custom_call.1} parent=11 // pred_check_branch
          %236 = sbr.rel (%p234) target = $region24
        $region23: #{tpu_custom_call.1} parent=11 // pred_region
          %s238 = ssub.s32 4096, 4096
          %239 = vsyncadd [#allocation8], %s238
          %s240 = sshll.u32 [#allocation9], 4
          %s241 = int_to_ptr.vmem [resolvable:$true] %s240
          %246 = dma.hbm_to_vmem [thread:$0]  %s3, 4096, %s241, [#allocation8], 256, 256, 16
        $region24: #{tpu_custom_call.1} parent=11 // pred_fallthru
          _
        // Predicated region
        $region25: #{tpu_custom_call.1} parent=11 // pred_check
          %p247 = pneg %p147
        $region26: #{tpu_custom_call.1} parent=11 // pred_check_branch
          %249 = sbr.rel (%p247) target = $region28
        $region27: #{tpu_custom_call.1} parent=11 // pred_region
          _
        $region28: #{tpu_custom_call.1} parent=11 // pred_fallthru
          _
      $region12: #{tpu_custom_call.1} parent=5 // pred_fallthru
        _
      %p250 = scmp.lt.s32.totalorder %s23, 2
      // Predicated region
      $region29: #{tpu_custom_call.1} parent=5 // pred_check
        %p251 = pneg %p250
      $region30: #{tpu_custom_call.1} parent=5 // pred_check_branch
        %253 = sbr.rel (%p251) target = $region32
      $region31: #{tpu_custom_call.1} parent=5 // pred_region
        // Predicated region
        $region33: #{tpu_custom_call.1} parent=31 // pred_check
          %p254 = pneg %p57
        $region34: #{tpu_custom_call.1} parent=31 // pred_check_branch
          %256 = sbr.rel (%p254) target = $region36
        $region35: #{tpu_custom_call.1} parent=31 // pred_region
          %s257 = sand.u32 %s47, 1
          %s258 = scalar_lea.sflag [#allocation5], %s257
          %s259 = sand.u32 %s47, 1
          %s260 = smul.addr %s259, 16
          %s261 = scalar_lea.vmem [#allocation4], %s260
          %s262 = smul.u32 2, %s31
          %s264 = ssub.s32 256, 256
          %265 = vsyncadd %s258, %s264
          %s266 = smul.addr %s30, 2
          %s267 = sadd.s32 %s262, %s266
          %s268 = smul.addr %s267, 128
          %s269 = scalar_lea.hbm %s0, %s268
          %s270 = sshll.u32 %s261, 4
          %s271 = int_to_ptr.vmem [resolvable:$true] %s270
          %276 = dma.hbm_to_vmem [thread:$0]  %s269, 256, %s271, %s258, 128, 128, 8
        $region36: #{tpu_custom_call.1} parent=31 // pred_fallthru
          _
      $region32: #{tpu_custom_call.1} parent=5 // pred_fallthru
        _
      %p277 = scmp.le.s32.totalorder 1, %s23
      %p278 = scmp.lt.s32.totalorder %s23, 3
      %p279 = pnand %p277, %p278
      %p280 = pneg %p279
      // Predicated region
      $region37: #{tpu_custom_call.1} parent=5 // pred_check
        _
      $region38: #{tpu_custom_call.1} parent=5 // pred_check_branch
        %282 = sbr.rel (%p279) target = $region40
      $region39: #{tpu_custom_call.1} parent=5 // pred_region
        %s283 = ssub.s32 %s23, 1
        %s284 = sand.u32 %s50, 1
        %s285 = scalar_lea.sflag [#allocation5], %s284
        %s286 = sand.u32 %s50, 1
        %s287 = smul.addr %s286, 16
        %s288 = scalar_lea.vmem [#allocation4], %s287
        // Predicated region
        $region41: #{tpu_custom_call.1} parent=39 // pred_check
          %p289 = pneg %p63
        $region42: #{tpu_custom_call.1} parent=39 // pred_check_branch
          %291 = sbr.rel (%p289) target = $region44
        $region43: #{tpu_custom_call.1} parent=39 // pred_region
          %292 = dma.done %s285, 256
        $region44: #{tpu_custom_call.1} parent=39 // pred_fallthru
          _
        // Predicated region
        $region45: #{tpu_custom_call.1} parent=39 // pred_check
          %p293 = pneg %p84
        $region46: #{tpu_custom_call.1} parent=39 // pred_check_branch
          %295 = sbr.rel (%p293) target = $region48
        $region47: #{tpu_custom_call.1} parent=39 // pred_region
          %296 = dma.done [#allocation8], 8192
        $region48: #{tpu_custom_call.1} parent=39 // pred_fallthru
          _
        // Predicated region
        $region49: #{tpu_custom_call.1} parent=39 // pred_check
          %p297 = pneg %p126
        $region50: #{tpu_custom_call.1} parent=39 // pred_check_branch
          %299 = sbr.rel (%p297) target = $region52
        $region51: #{tpu_custom_call.1} parent=39 // pred_region
          %300 = dma.done [#allocation8], 4096
        $region52: #{tpu_custom_call.1} parent=39 // pred_fallthru
          _
        %s301 = sand.u32 %s50, 1
        %s302 = scalar_lea.sflag [#allocation5], %s301
        %s303 = sand.u32 %s50, 1
        %s304 = smul.addr %s303, 16
        %s305 = scalar_lea.vmem [#allocation4], %s304
        %p306 = pneg %p63
        %p307 = pneg %p60
        %p308 = pneg %p84
        %p309 = pneg %p81
        %p310 = pneg %p105
        %p311 = pneg %p102
        %p312 = pneg %p126
        %p313 = pneg %p123
        %p314 = pneg %p147
        %p315 = pneg %p144
        %p316 = pneg %p175
        %p317 = pneg %p172
        %s318 = sand.u32 %s162, 1
        %s319 = scalar_lea.sflag [#allocation6], %s318
        %s320 = sand.u32 %s162, 1
        %s321 = smul.addr %s320, 16
        %s322 = scalar_lea.vmem [#allocation10], %s321
        %p323 = pneg %p203
        %p324 = pneg %p200
        %s325 = sand.u32 %s190, 1
        %s326 = scalar_lea.sflag [#allocation12], %s325
        %s327 = sand.u32 %s190, 1
        %s328 = smul.addr %s327, 16
        %s329 = scalar_lea.vmem [#allocation11], %s328
        %s330 = smul.u32 2, %s33
        %s331 = smul.u32 2, %s33
        %s332 = smul.u32 2, %s33
        %p333 = scmp.eq.s32.totalorder %s33, 0
        // Predicated region
        $region53: #{tpu_custom_call.1} parent=39 // pred_check
          %p334 = pneg %p333
        $region54: #{tpu_custom_call.1} parent=39 // pred_check_branch
          %336 = sbr.rel (%p334) target = $region56
        $region55: #{tpu_custom_call.1} parent=39 // pred_region
          %337 = vst [vmem:[#allocation2] sm:$0xff] 0.0
        $region56: #{tpu_custom_call.1} parent=39 // pred_fallthru
          _
        %p338 = scmp.gt.s32.totalorder %s33, 0
        // Predicated region
        $region57: #{tpu_custom_call.1} parent=39 // pred_check
          %p339 = pneg %p338
        $region58: #{tpu_custom_call.1} parent=39 // pred_check_branch
          %341 = sbr.rel (%p339) target = $region60
        $region59: #{tpu_custom_call.1} parent=39 // pred_region
          %v342 = vld [vmem:[#allocation3] sm:$0xff]
          %343 = vst [vmem:[#allocation2] sm:$0xff] %v342
        $region60: #{tpu_custom_call.1} parent=39 // pred_fallthru
          _
        %v344 = vld [vmem:[%s288] sm:$0xff]
        %v345 = vld [vmem:[%s288 + $0x8] sm:$0xff]
        %346 = vst [vmem:[#allocation2 + $0x8] sm:$0xff] %v344
        %347 = vst [vmem:[#allocation2 + $0x10] sm:$0xff] %v345
        %v348 = vld [vmem:[%s288 + $0x8] sm:$0xff]
        %349 = vst [vmem:[#allocation3] sm:$0xff] %v348
        %v350 = vld [vmem:[%s2] sm:$0x3]
        %v352 = vlaneseq
        %v353 = vshrl.u32 %v352, 7
        %v354 = vsub.s32 0, %v353
        %v355 = vrot.slane %v350, %v354
        %v356 = vlaneseq
        %v357 = vshrl.u32 %v356, 7
        %v358 = vsub.s32 1, %v357
        %v359 = vrot.slane %v350, %v358
        %v362 = vld [vmem:[%s4] sm:$0x3]
        %v364 = vlaneseq
        %v365 = vshrl.u32 %v364, 7
        %v366 = vsub.s32 0, %v365
        %v367 = vrot.slane %v362, %v366
        %v368 = vlaneseq
        %v369 = vshrl.u32 %v368, 7
        %v370 = vsub.s32 1, %v369
        %v371 = vrot.slane %v362, %v370
        %v374 = vld [vmem:[#allocation2 + $0x6] sm:$0xff]
        %v375 = vld [vmem:[#allocation2 + $0xe] sm:$0xff]
        %v376 = vld [vmem:[#allocation7] sm:$0xff]
        %v377 = vld [vmem:[#allocation7 + $0x8] sm:$0xff]
        %v378 = vld [vmem:[#allocation7 + $0x10] sm:$0xff]
        %v379 = vld [vmem:[#allocation7 + $0x18] sm:$0xff]
        %v380 = vld [vmem:[#allocation7 + $0x20] sm:$0xff]
        %v381 = vld [vmem:[#allocation7 + $0x28] sm:$0xff]
        %v382 = vld [vmem:[#allocation7 + $0x30] sm:$0xff]
        %v383 = vld [vmem:[#allocation7 + $0x38] sm:$0xff]
        %v384 = vld [vmem:[#allocation7 + $0x40] sm:$0xff]
        %v385 = vld [vmem:[#allocation7 + $0x48] sm:$0xff]
        %v386 = vld [vmem:[#allocation7 + $0x50] sm:$0xff]
        %v387 = vld [vmem:[#allocation7 + $0x58] sm:$0xff]
        %v388 = vld [vmem:[#allocation7 + $0x60] sm:$0xff]
        %v389 = vld [vmem:[#allocation7 + $0x68] sm:$0xff]
        %v390 = vld [vmem:[#allocation7 + $0x70] sm:$0xff]
        %v391 = vld [vmem:[#allocation7 + $0x78] sm:$0xff]
        %v392 = vld [vmem:[#allocation7 + $0x80] sm:$0xff]
        %v393 = vld [vmem:[#allocation7 + $0x88] sm:$0xff]
        %v394 = vld [vmem:[#allocation7 + $0x90] sm:$0xff]
        %v395 = vld [vmem:[#allocation7 + $0x98] sm:$0xff]
        %v396 = vld [vmem:[#allocation7 + $0xa0] sm:$0xff]
        %v397 = vld [vmem:[#allocation7 + $0xa8] sm:$0xff]
        %v398 = vld [vmem:[#allocation7 + $0xb0] sm:$0xff]
        %v399 = vld [vmem:[#allocation7 + $0xb8] sm:$0xff]
        %v400 = vld [vmem:[#allocation7 + $0xc0] sm:$0xff]
        %v401 = vld [vmem:[#allocation7 + $0xc8] sm:$0xff]
        %v402 = vld [vmem:[#allocation7 + $0xd0] sm:$0xff]
        %v403 = vld [vmem:[#allocation7 + $0xd8] sm:$0xff]
        %v404 = vld [vmem:[#allocation7 + $0xe0] sm:$0xff]
        %v405 = vld [vmem:[#allocation7 + $0xe8] sm:$0xff]
        %v406 = vld [vmem:[#allocation7 + $0xf0] sm:$0xff]
        %v407 = vld [vmem:[#allocation7 + $0xf8] sm:$0xff]
        %408 = vmatprep.subr.mxu0 %v377
        %409 = vmatpush1.msra.mxu0 %v376
        %410 = vmatprep.subr.mxu0 %v379
        %411 = vmatpush1.msra.mxu0 %v378
        %412 = vmatprep.subr.mxu0 %v381
        %413 = vmatpush1.msra.mxu0 %v380
        %414 = vmatprep.subr.mxu0 %v383
        %415 = vmatpush1.msra.mxu0 %v382
        %416 = vmatprep.subr.mxu0 %v385
        %417 = vmatpush1.msra.mxu0 %v384
        %418 = vmatprep.subr.mxu0 %v387
        %419 = vmatpush1.msra.mxu0 %v386
        %420 = vmatprep.subr.mxu0 %v389
        %421 = vmatpush1.msra.mxu0 %v388
        %422 = vmatprep.subr.mxu0 %v391
        %423 = vmatpush1.msra.mxu0 %v390
        %424 = vmatprep.subr.mxu0 %v393
        %425 = vmatpush1.msra.mxu0 %v392
        %426 = vmatprep.subr.mxu0 %v395
        %427 = vmatpush1.msra.mxu0 %v394
        %428 = vmatprep.subr.mxu0 %v397
        %429 = vmatpush1.msra.mxu0 %v396
        %430 = vmatprep.subr.mxu0 %v399
        %431 = vmatpush1.msra.mxu0 %v398
        %432 = vmatprep.subr.mxu0 %v401
        %433 = vmatpush1.msra.mxu0 %v400
        %434 = vmatprep.subr.mxu0 %v403
        %435 = vmatpush1.msra.mxu0 %v402
        %436 = vmatprep.subr.mxu0 %v405
        %437 = vmatpush1.msra.mxu0 %v404
        %438 = vmatprep.subr.mxu0 %v407
        %439 = vmatpush1.msra.mxu0 %v406
        %440 = vmatprep.subr.mxu0 0.0
        %441 = vmatpush1.msra.mxu0 0.0
        %442 = vmatprep.subr.mxu0 0.0
        %443 = vmatpush1.msra.mxu0 0.0
        %444 = vmatprep.subr.mxu0 0.0
        %445 = vmatpush1.msra.mxu0 0.0
        %446 = vmatprep.subr.mxu0 0.0
        %447 = vmatpush1.msra.mxu0 0.0
        %448 = vmatprep.subr.mxu0 0.0
        %449 = vmatpush1.msra.mxu0 0.0
        %450 = vmatprep.subr.mxu0 0.0
        %451 = vmatpush1.msra.mxu0 0.0
        %452 = vmatprep.subr.mxu0 0.0
        %453 = vmatpush1.msra.mxu0 0.0
        %454 = vmatprep.subr.mxu0 0.0
        %455 = vmatpush1.msra.mxu0 0.0
        %456 = vmatprep.subr.mxu0 0.0
        %457 = vmatpush1.msra.mxu0 0.0
        %458 = vmatprep.subr.mxu0 0.0
        %459 = vmatpush1.msra.mxu0 0.0
        %460 = vmatprep.subr.mxu0 0.0
        %461 = vmatpush1.msra.mxu0 0.0
        %462 = vmatprep.subr.mxu0 0.0
        %463 = vmatpush1.msra.mxu0 0.0
        %464 = vmatprep.subr.mxu0 0.0
        %465 = vmatpush1.msra.mxu0 0.0
        %466 = vmatprep.subr.mxu0 0.0
        %467 = vmatpush1.msra.mxu0 0.0
        %468 = vmatprep.subr.mxu0 0.0
        %469 = vmatpush1.msra.mxu0 0.0
        %470 = vmatprep.subr.mxu0 0.0
        %471 = vmatpush1.msra.mxu0 0.0
        %472 = vmatprep.mubr.f32.mxu0 0.0
        %473 = vmatmul.mubr.f32.gmra.mrb[0].mxu0 %v374
        %v474 = vpop.f32.mrb[0].mxu0
        %v475 = vadd.f32 0.0, %v474
        %v476 = vpop.f32.mrb[0].mxu0
        %v477 = vadd.f32 0.0, %v476
        %478 = vmatprep.mubr.f32.mxu0 0.0
        %479 = vmatmul.mubr.f32.gmra.mrb[0].mxu0 %v375
        %v480 = vpop.f32.mrb[0].mxu0
        %v481 = vadd.f32 0.0, %v480
        %v482 = vpop.f32.mrb[0].mxu0
        %v483 = vadd.f32 0.0, %v482
        %484 = vdwg.mxu0
        %v485 = vadd.f32 %v355, %v475
        %v486 = vadd.f32 %v359, %v477
        %v487 = vadd.f32 %v355, %v481
        %v488 = vadd.f32 %v359, %v483
        %v489 = vld [vmem:[#allocation2 + $0x8] sm:$0xff]
        %v490 = vld [vmem:[#allocation2 + $0x10] sm:$0xff]
        %s491 = scalar_lea.vmem [#allocation7], 256
        %v492 = vld [vmem:[%s491] sm:$0xff]
        %v493 = vld [vmem:[%s491 + $0x8] sm:$0xff]
        %v494 = vld [vmem:[%s491 + $0x10] sm:$0xff]
        %v495 = vld [vmem:[%s491 + $0x18] sm:$0xff]
        %v496 = vld [vmem:[%s491 + $0x20] sm:$0xff]
        %v497 = vld [vmem:[%s491 + $0x28] sm:$0xff]
        %v498 = vld [vmem:[%s491 + $0x30] sm:$0xff]
        %v499 = vld [vmem:[%s491 + $0x38] sm:$0xff]
        %v500 = vld [vmem:[%s491 + $0x40] sm:$0xff]
        %v501 = vld [vmem:[%s491 + $0x48] sm:$0xff]
        %v502 = vld [vmem:[%s491 + $0x50] sm:$0xff]
        %v503 = vld [vmem:[%s491 + $0x58] sm:$0xff]
        %v504 = vld [vmem:[%s491 + $0x60] sm:$0xff]
        %v505 = vld [vmem:[%s491 + $0x68] sm:$0xff]
        %v506 = vld [vmem:[%s491 + $0x70] sm:$0xff]
        %v507 = vld [vmem:[%s491 + $0x78] sm:$0xff]
        %v508 = vld [vmem:[%s491 + $0x80] sm:$0xff]
        %v509 = vld [vmem:[%s491 + $0x88] sm:$0xff]
        %v510 = vld [vmem:[%s491 + $0x90] sm:$0xff]
        %v511 = vld [vmem:[%s491 + $0x98] sm:$0xff]
        %v512 = vld [vmem:[%s491 + $0xa0] sm:$0xff]
        %v513 = vld [vmem:[%s491 + $0xa8] sm:$0xff]
        %v514 = vld [vmem:[%s491 + $0xb0] sm:$0xff]
        %v515 = vld [vmem:[%s491 + $0xb8] sm:$0xff]
        %v516 = vld [vmem:[%s491 + $0xc0] sm:$0xff]
        %v517 = vld [vmem:[%s491 + $0xc8] sm:$0xff]
        %v518 = vld [vmem:[%s491 + $0xd0] sm:$0xff]
        %v519 = vld [vmem:[%s491 + $0xd8] sm:$0xff]
        %v520 = vld [vmem:[%s491 + $0xe0] sm:$0xff]
        %v521 = vld [vmem:[%s491 + $0xe8] sm:$0xff]
        %v522 = vld [vmem:[%s491 + $0xf0] sm:$0xff]
        %v523 = vld [vmem:[%s491 + $0xf8] sm:$0xff]
        %524 = vmatprep.subr.mxu0 %v493
        %525 = vmatpush1.msra.mxu0 %v492
        %526 = vmatprep.subr.mxu0 %v495
        %527 = vmatpush1.msra.mxu0 %v494
        %528 = vmatprep.subr.mxu0 %v497
        %529 = vmatpush1.msra.mxu0 %v496
        %530 = vmatprep.subr.mxu0 %v499
        %531 = vmatpush1.msra.mxu0 %v498
        %532 = vmatprep.subr.mxu0 %v501
        %533 = vmatpush1.msra.mxu0 %v500
        %534 = vmatprep.subr.mxu0 %v503
        %535 = vmatpush1.msra.mxu0 %v502
        %536 = vmatprep.subr.mxu0 %v505
        %537 = vmatpush1.msra.mxu0 %v504
        %538 = vmatprep.subr.mxu0 %v507
        %539 = vmatpush1.msra.mxu0 %v506
        %540 = vmatprep.subr.mxu0 %v509
        %541 = vmatpush1.msra.mxu0 %v508
        %542 = vmatprep.subr.mxu0 %v511
        %543 = vmatpush1.msra.mxu0 %v510
        %544 = vmatprep.subr.mxu0 %v513
        %545 = vmatpush1.msra.mxu0 %v512
        %546 = vmatprep.subr.mxu0 %v515
        %547 = vmatpush1.msra.mxu0 %v514
        %548 = vmatprep.subr.mxu0 %v517
        %549 = vmatpush1.msra.mxu0 %v516
        %550 = vmatprep.subr.mxu0 %v519
        %551 = vmatpush1.msra.mxu0 %v518
        %552 = vmatprep.subr.mxu0 %v521
        %553 = vmatpush1.msra.mxu0 %v520
        %554 = vmatprep.subr.mxu0 %v523
        %555 = vmatpush1.msra.mxu0 %v522
        %556 = vmatprep.subr.mxu0 0.0
        %557 = vmatpush1.msra.mxu0 0.0
        %558 = vmatprep.subr.mxu0 0.0
        %559 = vmatpush1.msra.mxu0 0.0
        %560 = vmatprep.subr.mxu0 0.0
        %561 = vmatpush1.msra.mxu0 0.0
        %562 = vmatprep.subr.mxu0 0.0
        %563 = vmatpush1.msra.mxu0 0.0
        %564 = vmatprep.subr.mxu0 0.0
        %565 = vmatpush1.msra.mxu0 0.0
        %566 = vmatprep.subr.mxu0 0.0
        %567 = vmatpush1.msra.mxu0 0.0
        %568 = vmatprep.subr.mxu0 0.0
        %569 = vmatpush1.msra.mxu0 0.0
        %570 = vmatprep.subr.mxu0 0.0
        %571 = vmatpush1.msra.mxu0 0.0
        %572 = vmatprep.subr.mxu0 0.0
        %573 = vmatpush1.msra.mxu0 0.0
        %574 = vmatprep.subr.mxu0 0.0
        %575 = vmatpush1.msra.mxu0 0.0
        %576 = vmatprep.subr.mxu0 0.0
        %577 = vmatpush1.msra.mxu0 0.0
        %578 = vmatprep.subr.mxu0 0.0
        %579 = vmatpush1.msra.mxu0 0.0
        %580 = vmatprep.subr.mxu0 0.0
        %581 = vmatpush1.msra.mxu0 0.0
        %582 = vmatprep.subr.mxu0 0.0
        %583 = vmatpush1.msra.mxu0 0.0
        %584 = vmatprep.subr.mxu0 0.0
        %585 = vmatpush1.msra.mxu0 0.0
        %586 = vmatprep.subr.mxu0 0.0
        %587 = vmatpush1.msra.mxu0 0.0
        %588 = vmatprep.mubr.f32.mxu0 0.0
        %589 = vmatmul.mubr.f32.gmra.mrb[0].mxu0 %v489
        %v590 = vpop.f32.mrb[0].mxu0
        %v591 = vadd.f32 0.0, %v590
        %v592 = vpop.f32.mrb[0].mxu0
        %v593 = vadd.f32 0.0, %v592
        %594 = vmatprep.mubr.f32.mxu0 0.0
        %595 = vmatmul.mubr.f32.gmra.mrb[0].mxu0 %v490
        %v596 = vpop.f32.mrb[0].mxu0
        %v597 = vadd.f32 0.0, %v596
        %v598 = vpop.f32.mrb[0].mxu0
        %v599 = vadd.f32 0.0, %v598
        %600 = vdwg.mxu0
        %v601 = vadd.f32 %v485, %v591
        %v602 = vadd.f32 %v486, %v593
        %v603 = vadd.f32 %v487, %v597
        %v604 = vadd.f32 %v488, %v599
        %v605 = vxor.u32 %v602, 2147483648
        %v606 = vxor.u32 %v604, 2147483648
        %v607 = vmul.f32 %v605, 1.442695
        %v608 = vpow.pop %v607
        %v609 = vmul.f32 %v606, 1.442695
        %v610 = vpow.pop %v609
        %v611 = vadd.f32 %v608, 1.0
        %v612 = vadd.f32 %v610, 1.0
        %v613 = vrcp.pop %v611
        %v614 = vmul.f32 1.0, %v613
        %v615 = vrcp.pop %v612
        %v616 = vmul.f32 1.0, %v615
        %v617 = vmul.f32 %v601, %v614
        %v618 = vmul.f32 %v603, %v616
        %v619 = vld [vmem:[#allocation9] sm:$0xff]
        %v620 = vld [vmem:[#allocation9 + $0x8] sm:$0xff]
        %v621 = vld [vmem:[#allocation9 + $0x10] sm:$0xff]
        %v622 = vld [vmem:[#allocation9 + $0x18] sm:$0xff]
        %v623 = vld [vmem:[#allocation9 + $0x20] sm:$0xff]
        %v624 = vld [vmem:[#allocation9 + $0x28] sm:$0xff]
        %v625 = vld [vmem:[#allocation9 + $0x30] sm:$0xff]
        %v626 = vld [vmem:[#allocation9 + $0x38] sm:$0xff]
        %v627 = vld [vmem:[#allocation9 + $0x40] sm:$0xff]
        %v628 = vld [vmem:[#allocation9 + $0x48] sm:$0xff]
        %v629 = vld [vmem:[#allocation9 + $0x50] sm:$0xff]
        %v630 = vld [vmem:[#allocation9 + $0x58] sm:$0xff]
        %v631 = vld [vmem:[#allocation9 + $0x60] sm:$0xff]
        %v632 = vld [vmem:[#allocation9 + $0x68] sm:$0xff]
        %v633 = vld [vmem:[#allocation9 + $0x70] sm:$0xff]
        %v634 = vld [vmem:[#allocation9 + $0x78] sm:$0xff]
        %v635 = vld [vmem:[#allocation9 + $0x80] sm:$0xff]
        %v636 = vld [vmem:[#allocation9 + $0x88] sm:$0xff]
        %v637 = vld [vmem:[#allocation9 + $0x90] sm:$0xff]
        %v638 = vld [vmem:[#allocation9 + $0x98] sm:$0xff]
        %v639 = vld [vmem:[#allocation9 + $0xa0] sm:$0xff]
        %v640 = vld [vmem:[#allocation9 + $0xa8] sm:$0xff]
        %v641 = vld [vmem:[#allocation9 + $0xb0] sm:$0xff]
        %v642 = vld [vmem:[#allocation9 + $0xb8] sm:$0xff]
        %v643 = vld [vmem:[#allocation9 + $0xc0] sm:$0xff]
        %v644 = vld [vmem:[#allocation9 + $0xc8] sm:$0xff]
        %v645 = vld [vmem:[#allocation9 + $0xd0] sm:$0xff]
        %v646 = vld [vmem:[#allocation9 + $0xd8] sm:$0xff]
        %v647 = vld [vmem:[#allocation9 + $0xe0] sm:$0xff]
        %v648 = vld [vmem:[#allocation9 + $0xe8] sm:$0xff]
        %v649 = vld [vmem:[#allocation9 + $0xf0] sm:$0xff]
        %v650 = vld [vmem:[#allocation9 + $0xf8] sm:$0xff]
        %651 = vmatprep.subr.mxu0 %v620
        %652 = vmatpush1.msra.mxu0 %v619
        %653 = vmatprep.subr.mxu0 %v622
        %654 = vmatpush1.msra.mxu0 %v621
        %655 = vmatprep.subr.mxu0 %v624
        %656 = vmatpush1.msra.mxu0 %v623
        %657 = vmatprep.subr.mxu0 %v626
        %658 = vmatpush1.msra.mxu0 %v625
        %659 = vmatprep.subr.mxu0 %v628
        %660 = vmatpush1.msra.mxu0 %v627
        %661 = vmatprep.subr.mxu0 %v630
        %662 = vmatpush1.msra.mxu0 %v629
        %663 = vmatprep.subr.mxu0 %v632
        %664 = vmatpush1.msra.mxu0 %v631
        %665 = vmatprep.subr.mxu0 %v634
        %666 = vmatpush1.msra.mxu0 %v633
        %667 = vmatprep.subr.mxu0 %v636
        %668 = vmatpush1.msra.mxu0 %v635
        %669 = vmatprep.subr.mxu0 %v638
        %670 = vmatpush1.msra.mxu0 %v637
        %671 = vmatprep.subr.mxu0 %v640
        %672 = vmatpush1.msra.mxu0 %v639
        %673 = vmatprep.subr.mxu0 %v642
        %674 = vmatpush1.msra.mxu0 %v641
        %675 = vmatprep.subr.mxu0 %v644
        %676 = vmatpush1.msra.mxu0 %v643
        %677 = vmatprep.subr.mxu0 %v646
        %678 = vmatpush1.msra.mxu0 %v645
        %679 = vmatprep.subr.mxu0 %v648
        %680 = vmatpush1.msra.mxu0 %v647
        %681 = vmatprep.subr.mxu0 %v650
        %682 = vmatpush1.msra.mxu0 %v649
        %683 = vmatprep.subr.mxu0 0.0
        %684 = vmatpush1.msra.mxu0 0.0
        %685 = vmatprep.subr.mxu0 0.0
        %686 = vmatpush1.msra.mxu0 0.0
        %687 = vmatprep.subr.mxu0 0.0
        %688 = vmatpush1.msra.mxu0 0.0
        %689 = vmatprep.subr.mxu0 0.0
        %690 = vmatpush1.msra.mxu0 0.0
        %691 = vmatprep.subr.mxu0 0.0
        %692 = vmatpush1.msra.mxu0 0.0
        %693 = vmatprep.subr.mxu0 0.0
        %694 = vmatpush1.msra.mxu0 0.0
        %695 = vmatprep.subr.mxu0 0.0
        %696 = vmatpush1.msra.mxu0 0.0
        %697 = vmatprep.subr.mxu0 0.0
        %698 = vmatpush1.msra.mxu0 0.0
        %699 = vmatprep.subr.mxu0 0.0
        %700 = vmatpush1.msra.mxu0 0.0
        %701 = vmatprep.subr.mxu0 0.0
        %702 = vmatpush1.msra.mxu0 0.0
        %703 = vmatprep.subr.mxu0 0.0
        %704 = vmatpush1.msra.mxu0 0.0
        %705 = vmatprep.subr.mxu0 0.0
        %706 = vmatpush1.msra.mxu0 0.0
        %707 = vmatprep.subr.mxu0 0.0
        %708 = vmatpush1.msra.mxu0 0.0
        %709 = vmatprep.subr.mxu0 0.0
        %710 = vmatpush1.msra.mxu0 0.0
        %711 = vmatprep.subr.mxu0 0.0
        %712 = vmatpush1.msra.mxu0 0.0
        %713 = vmatprep.subr.mxu0 0.0
        %714 = vmatpush1.msra.mxu0 0.0
        %715 = vmatprep.mubr.f32.mxu0 0.0
        %716 = vmatmul.mubr.f32.gmra.mrb[0].mxu0 %v617
        %v717 = vpop.f32.mrb[0].mxu0
        %v718 = vadd.f32 %v367, %v717
        %v719 = vpop.f32.mrb[0].mxu0
        %v720 = vadd.f32 %v371, %v719
        %721 = vmatprep.mubr.f32.mxu0 0.0
        %722 = vmatmul.mubr.f32.gmra.mrb[0].mxu0 %v618
        %v723 = vpop.f32.mrb[0].mxu0
        %v724 = vadd.f32 %v367, %v723
        %v725 = vpop.f32.mrb[0].mxu0
        %v726 = vadd.f32 %v371, %v725
        %727 = vdwg.mxu0
        %v728 = vadd.f32 %v718, %v489
        %v729 = vadd.f32 %v724, %v490
        %730 = vst [vmem:[%s322] sm:$0xff] %v728
        %731 = vst [vmem:[%s322 + $0x8] sm:$0xff] %v729
        %732 = vst [vmem:[%s329] sm:$0xff] %v720
        %733 = vst [vmem:[%s329 + $0x8] sm:$0xff] %v726
        %s734 = sand.u32 %s162, 1
        %s735 = scalar_lea.sflag [#allocation6], %s734
        %s736 = sand.u32 %s162, 1
        %s737 = smul.addr %s736, 16
        %s738 = scalar_lea.vmem [#allocation10], %s737
        %s739 = sand.u32 %s190, 1
        %s740 = scalar_lea.sflag [#allocation12], %s739
        %s741 = sand.u32 %s190, 1
        %s742 = smul.addr %s741, 16
        %s743 = scalar_lea.vmem [#allocation11], %s742
        // Predicated region
        $region61: #{tpu_custom_call.1} parent=39 // pred_check
          %p744 = pneg %p172
        $region62: #{tpu_custom_call.1} parent=39 // pred_check_branch
          %746 = sbr.rel (%p744) target = $region64
        $region63: #{tpu_custom_call.1} parent=39 // pred_region
          %s747 = smul.u32 2, %s33
          %s749 = ssub.s32 256, 256
          %750 = vsyncadd %s735, %s749
          %s751 = smul.addr %s32, 2
          %s752 = sadd.s32 %s747, %s751
          %s753 = smul.addr %s752, 128
          %s754 = scalar_lea.hbm %s5, %s753
          %s755 = sshll.u32 %s738, 4
          %s756 = int_to_ptr.vmem [resolvable:$true] %s755
          %761 = dma.vmem_to_hbm [thread:$0]  %s756, 256, %s754, %s735, 128, 128, 8
        $region64: #{tpu_custom_call.1} parent=39 // pred_fallthru
          _
        // Predicated region
        $region65: #{tpu_custom_call.1} parent=39 // pred_check
          %p762 = pneg %p200
        $region66: #{tpu_custom_call.1} parent=39 // pred_check_branch
          %764 = sbr.rel (%p762) target = $region68
        $region67: #{tpu_custom_call.1} parent=39 // pred_region
          %s765 = smul.u32 2, %s33
          %s767 = ssub.s32 256, 256
          %768 = vsyncadd %s740, %s767
          %s769 = smul.addr %s32, 2
          %s770 = sadd.s32 %s765, %s769
          %s771 = smul.addr %s770, 128
          %s772 = scalar_lea.hbm %s6, %s771
          %s773 = sshll.u32 %s743, 4
          %s774 = int_to_ptr.vmem [resolvable:$true] %s773
          %779 = dma.vmem_to_hbm [thread:$0]  %s774, 256, %s772, %s740, 128, 128, 8
        $region68: #{tpu_custom_call.1} parent=39 // pred_fallthru
          _
      $region40: #{tpu_custom_call.1} parent=5 // pred_fallthru
        _
      %p780 = scmp.le.s32.totalorder 2, %s23
      // Predicated region
      $region69: #{tpu_custom_call.1} parent=5 // pred_check
        %p781 = pneg %p780
      $region70: #{tpu_custom_call.1} parent=5 // pred_check_branch
        %783 = sbr.rel (%p781) target = $region72
      $region71: #{tpu_custom_call.1} parent=5 // pred_region
        %s784 = ssub.s32 %s23, 2
        // Predicated region
        $region73: #{tpu_custom_call.1} parent=71 // pred_check
          %p785 = pneg %p178
        $region74: #{tpu_custom_call.1} parent=71 // pred_check_branch
          %787 = sbr.rel (%p785) target = $region76
        $region75: #{tpu_custom_call.1} parent=71 // pred_region
          %s788 = sand.u32 %s163, 1
          %s789 = scalar_lea.sflag [#allocation6], %s788
          %s790 = sand.u32 %s163, 1
          %s791 = smul.addr %s790, 16
          %s792 = scalar_lea.vmem [#allocation10], %s791
          %793 = dma.done %s789, 256
        $region76: #{tpu_custom_call.1} parent=71 // pred_fallthru
          _
        // Predicated region
        $region77: #{tpu_custom_call.1} parent=71 // pred_check
          %p794 = pneg %p206
        $region78: #{tpu_custom_call.1} parent=71 // pred_check_branch
          %796 = sbr.rel (%p794) target = $region80
        $region79: #{tpu_custom_call.1} parent=71 // pred_region
          %s797 = sand.u32 %s191, 1
          %s798 = scalar_lea.sflag [#allocation12], %s797
          %s799 = sand.u32 %s191, 1
          %s800 = smul.addr %s799, 16
          %s801 = scalar_lea.vmem [#allocation11], %s800
          %802 = dma.done %s798, 256
        $region80: #{tpu_custom_call.1} parent=71 // pred_fallthru
          _
      $region72: #{tpu_custom_call.1} parent=5 // pred_fallthru
        _
    $region6: #{tpu_custom_call.1} parent=1 // loop_footer
      %s27 = sadd.s32 1, %s23
    $region7: #{tpu_custom_call.1} parent=1 // loop_footer_branch
      %22 = sbr.rel target = $region3
    $region8: #{tpu_custom_call.1} parent=1 // loop_exit
      _
    %803 = vsyncpa [#allocation5], 1
    %s804 = scalar_lea.sflag [#allocation5], 1
    %805 = vsyncpa %s804, 1
    %806 = vsyncpa [#allocation8], 1
    %807 = vsyncpa [#allocation6], 1
    %s808 = scalar_lea.sflag [#allocation6], 1
    %809 = vsyncpa %s808, 1
    %810 = vsyncpa [#allocation12], 1
    %s811 = scalar_lea.sflag [#allocation12], 1
    %812 = vsyncpa %s811, 1

</llo_original>
